<compile_context>
chip_gen: v5e
topology: v5e:2x2
jax: 0.10.0
libtpu: 0.0.40
codegen_flags: <defaults>
</compile_context>

<pallas_src>
import functools

import jax
import jax.numpy as jnp
from jax import lax
from jax.experimental import pallas as pl
from jax.experimental.pallas import tpu as pltpu


def _round_up(n, m):
    return ((n + m - 1) // m) * m


# ----------------------------------------------------------------------------- kernel
def mlp_kernel(x_ref,
               w_in_ref, b_in_ref,
               w_h1_ref, b_h1_ref,
               w_h2_ref, b_h2_ref,
               w_pr_ref, b_pr_ref,
               out_ref, *, n_layer, n_output):
    """Fused Net forward for one batch tile; all weights resident in VMEM."""
    # x arrives as f32; cast to bf16 on the VPU (hidden under the input DMA / MXU).
    act = x_ref[...].astype(jnp.bfloat16)                      # (bt, F)

    # input_layer + relu  (bf16 MXU operands, f32 accumulate / bias / relu)
    z = jnp.dot(act, w_in_ref[...], preferred_element_type=jnp.float32) + b_in_ref[...]
    act = jnp.maximum(z, 0.0).astype(jnp.bfloat16)

    # hidden1 + relu
    z = jnp.dot(act, w_h1_ref[...], preferred_element_type=jnp.float32) + b_h1_ref[...]
    act = jnp.maximum(z, 0.0).astype(jnp.bfloat16)

    # n_layer x (hidden2 + relu): hoist the weight/bias loads so the bias broadcast
    # is emitted once, not once per iteration.
    w_h2 = w_h2_ref[...]
    b_h2 = b_h2_ref[...]

    def hidden2_step(a):
        zz = jnp.dot(a, w_h2, preferred_element_type=jnp.float32) + b_h2
        return jnp.maximum(zz, 0.0).astype(jnp.bfloat16)

    if n_layer <= 8:
        # Small static trip count: unroll fully at trace time.
        for _ in range(n_layer):
            act = hidden2_step(act)
    else:
        # Large trip count: rolled loop with partial unroll so the LLO scheduler can
        # overlap the VPU epilogue (bias+relu+cast) with MXU issue.
        act = lax.fori_loop(0, n_layer, lambda _, a: hidden2_step(a), act, unroll=4)

    # predict (no activation). w_pr is lane-dense (H2_p, O_mm) for the MXU; only the
    # first n_output columns are real, and only those are stored (unpadded output).
    out = jnp.dot(act, w_pr_ref[...], preferred_element_type=jnp.float32) + b_pr_ref[...]
    out_ref[...] = out[:, :n_output].astype(out_ref.dtype)


# --------------------------------------------------------------------- device queries
@functools.lru_cache(maxsize=1)
def _vmem_capacity_bytes():
    if hasattr(pltpu, "get_tpu_info"):
        try:
            cap = getattr(pltpu.get_tpu_info(), "vmem_capacity_bytes", None)
            if cap:
                return int(cap)
        except Exception:  # info query unavailable (e.g. interpret mode)
            pass
    return 64 * 1024 * 1024  # conservative: v7x per-TensorCore VMEM


@functools.lru_cache(maxsize=1)
def _single_buffer_supported():
    """One-time feature/lowering probe for pipeline_mode=pl.Buffered(1).

    This is a narrow probe on a trivial copy kernel; it does NOT wrap the real
    kernel, so genuine compile/VMEM errors there are surfaced, not masked.
    """
    if not hasattr(pl, "Buffered"):
        return False
    try:
        spec = pl.BlockSpec((8, 128), lambda i: (0, 0), pipeline_mode=pl.Buffered(1))

        def _probe(x_ref, o_ref):
            o_ref[...] = x_ref[...]

        call = pl.pallas_call(
            _probe,
            out_shape=jax.ShapeDtypeStruct((8, 128), jnp.float32),
            grid=(1,),
            in_specs=[spec],
            out_specs=pl.BlockSpec((8, 128), lambda i: (0, 0)),
        )
        jax.jit(call).lower(jax.ShapeDtypeStruct((8, 128), jnp.float32))
        return True
    except Exception:
        return False


# ------------------------------------------------------------------------ VMEM budget
def _weight_bytes(F, H1_p, H2_p, O_mm):
    return ((F * H1_p + H1_p * H2_p + H2_p * H2_p + H2_p * O_mm) * 2   # bf16 weights
            + (H1_p + 2 * H2_p + O_mm) * 4)                            # f32 biases


def _vmem_need_bytes(batch_tile, F, H1_p, H2_p, O_mm, n_output, weight_buffers):
    resident_w = weight_buffers * _weight_bytes(F, H1_p, H2_p, O_mm)
    io = 2 * batch_tile * F * 4 + 2 * batch_tile * n_output * 4        # dbl-buffered x/out
    live = batch_tile * max(H1_p, H2_p, O_mm) * (4 + 4 + 2)            # f32 z + relu + bf16 act
    return int((resident_w + io + live) * 1.25) + (4 << 20)            # + internal scratch


def _choose_tiling(B, F, H1_p, H2_p, O_mm, n_output, weight_buffers, max_batch_tile):
    cap = int(_vmem_capacity_bytes() * 0.85)
    B_8 = _round_up(max(B, 1), 8)
    if B_8 > 8:
        # Aim for >= 2 grid steps (keeps both v7x TensorCores busy) with tiles as
        # large as the budget / max_batch_tile allow.
        tile = min(_round_up(max_batch_tile, 8), _round_up(pl.cdiv(B_8, 2), 8))
    else:
        tile = B_8
    # Shrink the batch tile (never the resident weights) until the budget fits.
    while tile > 8 and _vmem_need_bytes(tile, F, H1_p, H2_p, O_mm, n_output,
                                        weight_buffers) > cap:
        tile = max(8, _round_up(tile // 2, 8))
    need = _vmem_need_bytes(tile, F, H1_p, H2_p, O_mm, n_output, weight_buffers)
    if need > cap:
        # TODO(synk): K/N-tile the hidden weights with pltpu.emit_pipeline once the
        # resident weights no longer fit VMEM (H2_p >~ 4k on v7x).
        raise NotImplementedError(
            f"resident weights need ~{need >> 20} MiB VMEM, exceeds ~{cap >> 20} MiB budget")
    B_p = _round_up(B_8, tile)
    vmem_limit = min(cap, max(need, 16 << 20))
    return tile, B_p, vmem_limit


# -------------------------------------------------------------------- pallas_call build
@functools.lru_cache(maxsize=None)
def _build_forward(B_p, batch_tile, F, H1_p, H2_p, O_mm, n_output, n_layer,
                   single_buffer, vmem_limit):
    kernel = functools.partial(mlp_kernel, n_layer=n_layer, n_output=n_output)

    # Weight/bias block indices never change across the grid -> single-buffer them
    # when supported (halves their resident VMEM; matters most on v7x's 64 MiB).
    spec_kw = dict(pipeline_mode=pl.Buffered(1)) if single_buffer else {}

    def full_spec(shape):
        return pl.BlockSpec(shape, lambda i: (0, 0), **spec_kw)

    return pl.pallas_call(
        kernel,
        out_shape=jax.ShapeDtypeStruct((B_p, n_output), jnp.float32),
        grid_spec=pltpu.PrefetchScalarGridSpec(
            num_scalar_prefetch=0,
            grid=(B_p // batch_tile,),
            in_specs=[
                pl.BlockSpec((batch_tile, F), lambda i: (i, 0)),     # x (f32, unpadded lanes)
                full_spec((F, H1_p)),   full_spec((1, H1_p)),        # input_layer
                full_spec((H1_p, H2_p)), full_spec((1, H2_p)),       # hidden1
                full_spec((H2_p, H2_p)), full_spec((1, H2_p)),       # hidden2
                full_spec((H2_p, O_mm)), full_spec((1, O_mm)),       # predict
            ],
            out_specs=pl.BlockSpec((batch_tile, n_output), lambda i: (i, 0)),
        ),
        compiler_params=pltpu.CompilerParams(
            dimension_semantics=("parallel",),
            vmem_limit_bytes=int(vmem_limit),
        ),
    )


# ------------------------------------------------------------------------ public API
def prepare_params(params, *, lane_align=128):
    """Pad + cast the weights ONCE (hoist this out of the training/inference loop).

    Weights (stored (in, out), i.e. already transposed vs torch.nn.Linear) -> bf16
    MXU operands with lane-aligned output columns; biases -> f32 rows (1, padded).
    The input-feature dim of w_in is left unpadded (x is not lane-padded), and the
    predict weight keeps a lane-dense 128-multiple column count for the MXU even
    though the kernel's output store is unpadded.
    """
    F = params["w_in"].shape[0]
    H1 = params["w_in"].shape[1]
    H2 = params["w_h1"].shape[1]
    O = params["w_pr"].shape[1]
    H1_p = _round_up(H1, lane_align)
    H2_p = _round_up(H2, lane_align)
    O_mm = _round_up(O, 128)

    def pad(a, rows, cols, dtype):
        r, c = a.shape
        return jnp.pad(a, ((0, rows - r), (0, cols - c))).astype(dtype)

    return dict(
        w_in=pad(params["w_in"], F, H1_p, jnp.bfloat16),
        b_in=pad(params["b_in"], 1, H1_p, jnp.float32),
        w_h1=pad(params["w_h1"], H1_p, H2_p, jnp.bfloat16),
        b_h1=pad(params["b_h1"], 1, H2_p, jnp.float32),
        w_h2=pad(params["w_h2"], H2_p, H2_p, jnp.bfloat16),
        b_h2=pad(params["b_h2"], 1, H2_p, jnp.float32),
        w_pr=pad(params["w_pr"], H2_p, O_mm, jnp.bfloat16),
        b_pr=pad(params["b_pr"], 1, O_mm, jnp.float32),
    )


def net_forward(x, padded_params, *, n_output, n_layer, max_batch_tile=512):
    """Forward pass of Net.

    x: (B, n_feature) float32 (unpadded). padded_params: output of prepare_params().
    Returns (B, n_output) float32.  jit-compatible with n_output/n_layer static.
    """
    B, F = x.shape
    H1_p = padded_params["w_in"].shape[1]
    H2_p = padded_params["w_h1"].shape[1]
    O_mm = padded_params["w_pr"].shape[1]
    assert padded_params["w_in"].shape[0] == F, "x feature dim must match w_in rows"

    single_buffer = _single_buffer_supported()
    weight_buffers = 1 if single_buffer else 2
    batch_tile, B_p, vmem_limit = _choose_tiling(
        B, F, H1_p, H2_p, O_mm, n_output, weight_buffers, max_batch_tile)

    x_p = x if B_p == B else jnp.pad(x, ((0, B_p - B), (0, 0)))

    fwd = _build_forward(B_p, batch_tile, F, H1_p, H2_p, O_mm, n_output, n_layer,
                         single_buffer, vmem_limit)
    out = fwd(x_p,
              padded_params["w_in"], padded_params["b_in"],
              padded_params["w_h1"], padded_params["b_h1"],
              padded_params["w_h2"], padded_params["b_h2"],
              padded_params["w_pr"], padded_params["b_pr"])
    return out if B_p == B else out[:B, :]


# ------------------------------------------------------------------------- reference
def init_params(key, n_feature, n_output, n_neuron1, n_neuron2):
    """torch.nn.Linear-style U(-1/sqrt(fan_in), 1/sqrt(fan_in)) init; weights (in, out)."""
    ks = jax.random.split(key, 8)

    def linear(kw, kb, fan_in, fan_out):
        bound = 1.0 / jnp.sqrt(jnp.float32(fan_in))
        w = jax.random.uniform(kw, (fan_in, fan_out), jnp.float32, -bound, bound)
        b = jax.random.uniform(kb, (1, fan_out), jnp.float32, -bound, bound)
        return w, b

    w_in, b_in = linear(ks[0], ks[1], n_feature, n_neuron1)
    w_h1, b_h1 = linear(ks[2], ks[3], n_neuron1, n_neuron2)
    w_h2, b_h2 = linear(ks[4], ks[5], n_neuron2, n_neuron2)
    w_pr, b_pr = linear(ks[6], ks[7], n_neuron2, n_output)
    return dict(w_in=w_in, b_in=b_in, w_h1=w_h1, b_h1=b_h1,
                w_h2=w_h2, b_h2=b_h2, w_pr=w_pr, b_pr=b_pr)


def reference_forward(x, params, *, n_layer):
    """Plain-JAX reference with the same bf16-operand / f32-accumulate numerics."""
    def lin(a, w, b):
        return jnp.dot(a.astype(jnp.bfloat16), w.astype(jnp.bfloat16),
                       preferred_element_type=jnp.float32) + b

    out = jnp.maximum(lin(x, params["w_in"], params["b_in"]), 0.0)
    out = jnp.maximum(lin(out, params["w_h1"], params["b_h1"]), 0.0)
    for _ in range(n_layer):
        out = jnp.maximum(lin(out, params["w_h2"], params["b_h2"]), 0.0)
    return lin(out, params["w_pr"], params["b_pr"])


if __name__ == "__main__":
    # Small shapes consistent with Net(n_feature, n_output, n_neuron1, n_neuron2, n_layer)
    batch, n_feature, n_output = 16, 64, 1
    n_neuron1, n_neuron2, n_layer = 32, 32, 2

    key = jax.random.PRNGKey(0)
    kx, kp = jax.random.split(key)
    x = jax.random.normal(kx, (batch, n_feature), jnp.float32)
    params = init_params(kp, n_feature, n_output, n_neuron1, n_neuron2)

    # Hoisted: pad/cast the weights once, outside the per-step path.
    padded = prepare_params(params)

    y = net_forward(x, padded, n_output=n_output, n_layer=n_layer)
    y = jax.block_until_ready(y)

    y_ref = reference_forward(x, params, n_layer=n_layer)
    assert y.shape == (batch, n_output)
    assert jnp.allclose(y, y_ref, atol=1e-3, rtol=1e-3), "mismatch vs reference"

    print("KERNEL_OK")
</pallas_src>

<mosaic_0001>
module attributes {stable_mosaic.version = 11 : i64} {
  func.func @mlp_kernel(%arg0: i32, %arg1: memref<8x64xf32, #tpu.memory_space<vmem>>, %arg2: memref<64x128xbf16, #tpu.memory_space<vmem>>, %arg3: memref<1x128xf32, #tpu.memory_space<vmem>>, %arg4: memref<128x128xbf16, #tpu.memory_space<vmem>>, %arg5: memref<1x128xf32, #tpu.memory_space<vmem>>, %arg6: memref<128x128xbf16, #tpu.memory_space<vmem>>, %arg7: memref<1x128xf32, #tpu.memory_space<vmem>>, %arg8: memref<128x128xbf16, #tpu.memory_space<vmem>>, %arg9: memref<1x128xf32, #tpu.memory_space<vmem>>, %arg10: memref<8x1xf32, #tpu.memory_space<vmem>>) attributes {dimension_semantics = [#tpu.dimension_semantics<parallel>], iteration_bounds = array<i64: 2>, scalar_prefetch = 0 : i64, scratch_operands = 0 : i64, tpu.core_type = #tpu.core_type<tc>, window_params = [{transform_indices = @transform_0, window_bounds = array<i64: 8, 64>}, {pipeline_mode = #tpu.pipeline_mode<synchronous>, transform_indices = @transform_1, window_bounds = array<i64: 64, 128>}, {pipeline_mode = #tpu.pipeline_mode<synchronous>, transform_indices = @transform_2, window_bounds = array<i64: 1, 128>}, {pipeline_mode = #tpu.pipeline_mode<synchronous>, transform_indices = @transform_3, window_bounds = array<i64: 128, 128>}, {pipeline_mode = #tpu.pipeline_mode<synchronous>, transform_indices = @transform_4, window_bounds = array<i64: 1, 128>}, {pipeline_mode = #tpu.pipeline_mode<synchronous>, transform_indices = @transform_5, window_bounds = array<i64: 128, 128>}, {pipeline_mode = #tpu.pipeline_mode<synchronous>, transform_indices = @transform_6, window_bounds = array<i64: 1, 128>}, {pipeline_mode = #tpu.pipeline_mode<synchronous>, transform_indices = @transform_7, window_bounds = array<i64: 128, 128>}, {pipeline_mode = #tpu.pipeline_mode<synchronous>, transform_indices = @transform_8, window_bounds = array<i64: 1, 128>}, {transform_indices = @transform_9, window_bounds = array<i64: 8, 1>}]} {
    %c0 = arith.constant 0 : index
    %c0_0 = arith.constant 0 : index
    %0 = vector.load %arg1[%c0, %c0_0] : memref<8x64xf32, #tpu.memory_space<vmem>>, vector<8x64xf32>
    %1 = arith.truncf %0 : vector<8x64xf32> to vector<8x64xbf16>
    %c0_1 = arith.constant 0 : index
    %c0_2 = arith.constant 0 : index
    %2 = vector.load %arg2[%c0_1, %c0_2] : memref<64x128xbf16, #tpu.memory_space<vmem>>, vector<64x128xbf16>
    %cst = arith.constant dense<0.000000e+00> : vector<8x128xf32>
    %3 = tpu.matmul %1, %2, %cst {dimension_numbers = #tpu.dot_dimension_numbers<[1], [0], [0], [1], [0, 0, 1, 1], [], []>} : vector<8x64xbf16>, vector<64x128xbf16>, vector<8x128xf32> -> vector<8x128xf32>
    %c0_3 = arith.constant 0 : index
    %c0_4 = arith.constant 0 : index
    %4 = vector.load %arg3[%c0_3, %c0_4] : memref<1x128xf32, #tpu.memory_space<vmem>>, vector<1x128xf32>
    %5 = vector.broadcast %4 : vector<1x128xf32> to vector<8x128xf32>
    %6 = arith.addf %3, %5 : vector<8x128xf32>
    %cst_5 = arith.constant 0.000000e+00 : f32
    %7 = vector.broadcast %cst_5 : f32 to vector<8x128xf32>
    %8 = arith.maximumf %6, %7 : vector<8x128xf32>
    %9 = arith.truncf %8 : vector<8x128xf32> to vector<8x128xbf16>
    %c0_6 = arith.constant 0 : index
    %c0_7 = arith.constant 0 : index
    %10 = vector.load %arg4[%c0_6, %c0_7] : memref<128x128xbf16, #tpu.memory_space<vmem>>, vector<128x128xbf16>
    %cst_8 = arith.constant dense<0.000000e+00> : vector<8x128xf32>
    %11 = tpu.matmul %9, %10, %cst_8 {dimension_numbers = #tpu.dot_dimension_numbers<[1], [0], [0], [1], [0, 0, 1, 1], [], []>} : vector<8x128xbf16>, vector<128x128xbf16>, vector<8x128xf32> -> vector<8x128xf32>
    %c0_9 = arith.constant 0 : index
    %c0_10 = arith.constant 0 : index
    %12 = vector.load %arg5[%c0_9, %c0_10] : memref<1x128xf32, #tpu.memory_space<vmem>>, vector<1x128xf32>
    %13 = vector.broadcast %12 : vector<1x128xf32> to vector<8x128xf32>
    %14 = arith.addf %11, %13 : vector<8x128xf32>
    %cst_11 = arith.constant 0.000000e+00 : f32
    %15 = vector.broadcast %cst_11 : f32 to vector<8x128xf32>
    %16 = arith.maximumf %14, %15 : vector<8x128xf32>
    %17 = arith.truncf %16 : vector<8x128xf32> to vector<8x128xbf16>
    %c0_12 = arith.constant 0 : index
    %c0_13 = arith.constant 0 : index
    %18 = vector.load %arg6[%c0_12, %c0_13] : memref<128x128xbf16, #tpu.memory_space<vmem>>, vector<128x128xbf16>
    %c0_14 = arith.constant 0 : index
    %c0_15 = arith.constant 0 : index
    %19 = vector.load %arg7[%c0_14, %c0_15] : memref<1x128xf32, #tpu.memory_space<vmem>>, vector<1x128xf32>
    %cst_16 = arith.constant dense<0.000000e+00> : vector<8x128xf32>
    %20 = tpu.matmul %17, %18, %cst_16 {dimension_numbers = #tpu.dot_dimension_numbers<[1], [0], [0], [1], [0, 0, 1, 1], [], []>} : vector<8x128xbf16>, vector<128x128xbf16>, vector<8x128xf32> -> vector<8x128xf32>
    %21 = vector.broadcast %19 : vector<1x128xf32> to vector<8x128xf32>
    %22 = arith.addf %20, %21 : vector<8x128xf32>
    %cst_17 = arith.constant 0.000000e+00 : f32
    %23 = vector.broadcast %cst_17 : f32 to vector<8x128xf32>
    %24 = arith.maximumf %22, %23 : vector<8x128xf32>
    %25 = arith.truncf %24 : vector<8x128xf32> to vector<8x128xbf16>
    %cst_18 = arith.constant dense<0.000000e+00> : vector<8x128xf32>
    %26 = tpu.matmul %25, %18, %cst_18 {dimension_numbers = #tpu.dot_dimension_numbers<[1], [0], [0], [1], [0, 0, 1, 1], [], []>} : vector<8x128xbf16>, vector<128x128xbf16>, vector<8x128xf32> -> vector<8x128xf32>
    %27 = vector.broadcast %19 : vector<1x128xf32> to vector<8x128xf32>
    %28 = arith.addf %26, %27 : vector<8x128xf32>
    %cst_19 = arith.constant 0.000000e+00 : f32
    %29 = vector.broadcast %cst_19 : f32 to vector<8x128xf32>
    %30 = arith.maximumf %28, %29 : vector<8x128xf32>
    %31 = arith.truncf %30 : vector<8x128xf32> to vector<8x128xbf16>
    %c0_20 = arith.constant 0 : index
    %c0_21 = arith.constant 0 : index
    %32 = vector.load %arg8[%c0_20, %c0_21] : memref<128x128xbf16, #tpu.memory_space<vmem>>, vector<128x128xbf16>
    %cst_22 = arith.constant dense<0.000000e+00> : vector<8x128xf32>
    %33 = tpu.matmul %31, %32, %cst_22 {dimension_numbers = #tpu.dot_dimension_numbers<[1], [0], [0], [1], [0, 0, 1, 1], [], []>} : vector<8x128xbf16>, vector<128x128xbf16>, vector<8x128xf32> -> vector<8x128xf32>
    %c0_23 = arith.constant 0 : index
    %c0_24 = arith.constant 0 : index
    %34 = vector.load %arg9[%c0_23, %c0_24] : memref<1x128xf32, #tpu.memory_space<vmem>>, vector<1x128xf32>
    %35 = vector.broadcast %34 : vector<1x128xf32> to vector<8x128xf32>
    %36 = arith.addf %33, %35 : vector<8x128xf32>
    %37 = vector.extract_strided_slice %36 {offsets = [0, 0], sizes = [8, 1], strides = [1, 1]} : vector<8x128xf32> to vector<8x1xf32>
    %c0_25 = arith.constant 0 : index
    %c0_26 = arith.constant 0 : index
    %38 = vector.load %arg10[%c0_25, %c0_26] : memref<8x1xf32, #tpu.memory_space<vmem>>, vector<8x1xf32>
    tpu.vector_store %arg10[%c0_25, %c0_26], %37 {strides = array<i32>} : memref<8x1xf32, #tpu.memory_space<vmem>>, vector<8x1xf32>,
    return
  }
  func.func @transform_0(%arg0: i32) -> (i32, i32) {
    %c0_i32 = arith.constant 0 : i32
    %c0_i32_0 = arith.constant 0 : i32
    return %arg0, %c0_i32 : i32, i32
  }
  func.func @transform_1(%arg0: i32) -> (i32, i32) {
    %c0_i32 = arith.constant 0 : i32
    %c0_i32_0 = arith.constant 0 : i32
    %c0_i32_1 = arith.constant 0 : i32
    return %c0_i32, %c0_i32_0 : i32, i32
  }
  func.func @transform_2(%arg0: i32) -> (i32, i32) {
    %c0_i32 = arith.constant 0 : i32
    %c0_i32_0 = arith.constant 0 : i32
    %c0_i32_1 = arith.constant 0 : i32
    return %c0_i32, %c0_i32_0 : i32, i32
  }
  func.func @transform_3(%arg0: i32) -> (i32, i32) {
    %c0_i32 = arith.constant 0 : i32
    %c0_i32_0 = arith.constant 0 : i32
    %c0_i32_1 = arith.constant 0 : i32
    return %c0_i32, %c0_i32_0 : i32, i32
  }
  func.func @transform_4(%arg0: i32) -> (i32, i32) {
    %c0_i32 = arith.constant 0 : i32
    %c0_i32_0 = arith.constant 0 : i32
    %c0_i32_1 = arith.constant 0 : i32
    return %c0_i32, %c0_i32_0 : i32, i32
  }
  func.func @transform_5(%arg0: i32) -> (i32, i32) {
    %c0_i32 = arith.constant 0 : i32
    %c0_i32_0 = arith.constant 0 : i32
    %c0_i32_1 = arith.constant 0 : i32
    return %c0_i32, %c0_i32_0 : i32, i32
  }
  func.func @transform_6(%arg0: i32) -> (i32, i32) {
    %c0_i32 = arith.constant 0 : i32
    %c0_i32_0 = arith.constant 0 : i32
    %c0_i32_1 = arith.constant 0 : i32
    return %c0_i32, %c0_i32_0 : i32, i32
  }
  func.func @transform_7(%arg0: i32) -> (i32, i32) {
    %c0_i32 = arith.constant 0 : i32
    %c0_i32_0 = arith.constant 0 : i32
    %c0_i32_1 = arith.constant 0 : i32
    return %c0_i32, %c0_i32_0 : i32, i32
  }
  func.func @transform_8(%arg0: i32) -> (i32, i32) {
    %c0_i32 = arith.constant 0 : i32
    %c0_i32_0 = arith.constant 0 : i32
    %c0_i32_1 = arith.constant 0 : i32
    return %c0_i32, %c0_i32_0 : i32, i32
  }
  func.func @transform_9(%arg0: i32) -> (i32, i32) {
    %c0_i32 = arith.constant 0 : i32
    %c0_i32_0 = arith.constant 0 : i32
    return %arg0, %c0_i32 : i32, i32
  }
}

</mosaic_0001>

<llo_original>
// kernel: tpu_custom_call.1
$region0: #{tpu_custom_call.1}
  #allocation0 [shape = 'u32[]', space=smem, size = 0x4, offset = 0x4, fixed_abs, tag = 'smem constant byte address 0x4 - core index']
  #allocation1 [shape = 'u32[72,128]{1,0:T(1,128)}', space=vmem, size = 0x9000, scoped, tag = 'internal scratch']
  %s0 = inlined_call_operand.hbm [shape: f32[16,64], index: 0, kind: input, shape index: {}]
  %s1 = inlined_call_operand.hbm [shape: bf16[64,128], index: 1, kind: input, shape index: {}]
  %s2 = inlined_call_operand.vmem [shape: f32[1,128], index: 2, kind: input, shape index: {}]
  %s3 = inlined_call_operand.hbm [shape: bf16[128,128], index: 3, kind: input, shape index: {}]
  %s4 = inlined_call_operand.vmem [shape: f32[1,128], index: 4, kind: input, shape index: {}]
  %s5 = inlined_call_operand.hbm [shape: bf16[128,128], index: 5, kind: input, shape index: {}]
  %s6 = inlined_call_operand.vmem [shape: f32[1,128], index: 6, kind: input, shape index: {}]
  %s7 = inlined_call_operand.hbm [shape: bf16[128,128], index: 7, kind: input, shape index: {}]
  %s8 = inlined_call_operand.vmem [shape: f32[1,128], index: 8, kind: input, shape index: {}]
  %s9 = inlined_call_operand.vmem [shape: f32[16,1], index: 9, kind: output, shape index: {}]
  %s10 = sld [smem:[#allocation0]]
  $region89: #{tpu_custom_call.1} parent=0
    _
  %s12 = ssub.s32 1, %s10
  %s13 = scalar_select 0, %s12, %s10
  $region1: #{tpu_custom_call.1} parent=0
    #allocation2 [shape = 'u8[8192]{0}', space=vmem, size = 0x2000, scoped, tag = 'input window, operand 0']
    #allocation3 [shape = 's32[2]{0}', space=sflag, size = 0x8, scoped, tag = 'scoped memory for tpu_custom_call.1']
    #allocation4 [shape = 'u8[16384]{0}', space=vmem, size = 0x4000, scoped, tag = 'input window, operand 1, single buffered']
    #allocation5 [shape = 's32[1]{0}', space=sflag, size = 0x4, scoped, tag = 'scoped memory for tpu_custom_call.1']
    #allocation6 [shape = 'u8[32768]{0}', space=vmem, size = 0x8000, scoped, tag = 'input window, operand 3, single buffered']
    #allocation7 [shape = 'u8[32768]{0}', space=vmem, size = 0x8000, scoped, tag = 'input window, operand 5, single buffered']
    #allocation8 [shape = 's32[1]{0}', space=sflag, size = 0x4, scoped, tag = 'scoped memory for tpu_custom_call.1']
    #allocation9 [shape = 'u8[32768]{0}', space=vmem, size = 0x8000, scoped, tag = 'input window, operand 7, single buffered']
    %14 = vsyncpa [#allocation3], 0
    %s15 = scalar_lea.sflag [#allocation3], 1
    %16 = vsyncpa %s15, 0
    %17 = vsyncpa [#allocation5], 0
    %18 = vsyncpa [#allocation8], 0
    loop: start=0, step=1, limit=4
    $region2: #{tpu_custom_call.1} parent=1 // loop_pre_header
      _
    $region3: #{tpu_custom_call.1} parent=1 // loop_header
      %s20 = sphi 0, %s24
      %p21 = scmp.ge.s32.totalorder %s20, 4
      %s30 = sphi 0, %s32
      %s33 = sphi 0, %s30
      %s34 = sphi 0, %s33
      %s50 = sphi 0, %s34
      %s54 = sphi 0, %s54
      %s56 = sphi 0, %s54
      %s57 = sphi 0, %s56
      %s71 = sphi 0, %s57
      %s75 = sphi 0, %s75
      %s77 = sphi 0, %s75
      %s78 = sphi 0, %s77
      %s92 = sphi 0, %s78
      %s96 = sphi 0, %s96
      %s98 = sphi 0, %s96
      %s99 = sphi 0, %s98
      %s113 = sphi 0, %s99
      %s117 = sphi 0, %s117
      %s119 = sphi 0, %s117
      %s120 = sphi 0, %s119
      %s134 = sphi 0, %s120
      %s138 = sphi 0, %s138
      %s140 = sphi 0, %s138
      %s141 = sphi 0, %s140
      %s155 = sphi 0, %s141
      %s159 = sphi 0, %s159
      %s161 = sphi 0, %s159
      %s162 = sphi 0, %s161
      %s176 = sphi 0, %s162
      %s180 = sphi 0, %s180
      %s182 = sphi 0, %s180
      %s183 = sphi 0, %s182
      %s197 = sphi 0, %s183
      %s201 = sphi 0, %s201
      %s203 = sphi 0, %s201
      %s204 = sphi 0, %s203
      %s218 = sphi 0, %s204
      %s224 = sphi 0, %s226
      %s227 = sphi 0, %s224
      %s228 = sphi 0, %s227
      %s244 = sphi 0, %s228
    $region4: #{tpu_custom_call.1} parent=1 // loop_header_branch
      %23 = sbr.rel (%p21) target = $region8
    $region5: #{tpu_custom_call.1} parent=1 // loop_body
      %s25 = ssub.s32 %s20, 1
      %s26 = ssub.s32 %s20, 2
      %s27 = sadd.s32 %s20, 1
      %s28 = ssub.s32 %s20, %s27
      %p29 = scmp.eq.s32.totalorder %s28, 0
      %s31 = sadd.s32 %s30, 1
      %s32 = scalar_select %p29, %s30, %s31
      %p35 = pneg %p29
      %p36 = scmp.eq.s32.totalorder %s20, 1
      %p37 = por %p35, %p36
      %p38 = scmp.ne.s32.totalorder %s30, %s33
      %p39 = scmp.eq.s32.totalorder %s20, 0
      %p40 = por %p38, %p39
      %p41 = scmp.ne.s32.totalorder %s30, %s33
      %p42 = scmp.eq.s32.totalorder %s25, 1
      %p43 = por %p41, %p42
      %p44 = scmp.ne.s32.totalorder %s33, %s34
      %p45 = scmp.eq.s32.totalorder %s25, 0
      %p46 = por %p44, %p45
      %p47 = scmp.ne.s32.totalorder %s33, %s34
      %p48 = scmp.eq.s32.totalorder %s26, 1
      %p49 = por %p47, %p48
      %p51 = scmp.ne.s32.totalorder %s34, %s50
      %p52 = scmp.eq.s32.totalorder %s26, 0
      %p53 = por %p51, %p52
      %s55 = sadd.s32 %s54, 1
      %p58 = scmp.eq.s32.totalorder %s20, 1
      %p59 = scmp.ne.s32.totalorder %s54, %s56
      %p60 = scmp.eq.s32.totalorder %s20, 0
      %p61 = por %p59, %p60
      %p62 = scmp.ne.s32.totalorder %s54, %s56
      %p63 = scmp.eq.s32.totalorder %s25, 1
      %p64 = por %p62, %p63
      %p65 = scmp.ne.s32.totalorder %s56, %s57
      %p66 = scmp.eq.s32.totalorder %s25, 0
      %p67 = por %p65, %p66
      %p68 = scmp.ne.s32.totalorder %s56, %s57
      %p69 = scmp.eq.s32.totalorder %s26, 1
      %p70 = por %p68, %p69
      %p72 = scmp.ne.s32.totalorder %s57, %s71
      %p73 = scmp.eq.s32.totalorder %s26, 0
      %p74 = por %p72, %p73
      %s76 = sadd.s32 %s75, 1
      %p79 = scmp.eq.s32.totalorder %s20, 1
      %p80 = scmp.ne.s32.totalorder %s75, %s77
      %p81 = scmp.eq.s32.totalorder %s20, 0
      %p82 = por %p80, %p81
      %p83 = scmp.ne.s32.totalorder %s75, %s77
      %p84 = scmp.eq.s32.totalorder %s25, 1
      %p85 = por %p83, %p84
      %p86 = scmp.ne.s32.totalorder %s77, %s78
      %p87 = scmp.eq.s32.totalorder %s25, 0
      %p88 = por %p86, %p87
      %p89 = scmp.ne.s32.totalorder %s77, %s78
      %p90 = scmp.eq.s32.totalorder %s26, 1
      %p91 = por %p89, %p90
      %p93 = scmp.ne.s32.totalorder %s78, %s92
      %p94 = scmp.eq.s32.totalorder %s26, 0
      %p95 = por %p93, %p94
      %s97 = sadd.s32 %s96, 1
      %p100 = scmp.eq.s32.totalorder %s20, 1
      %p101 = scmp.ne.s32.totalorder %s96, %s98
      %p102 = scmp.eq.s32.totalorder %s20, 0
      %p103 = por %p101, %p102
      %p104 = scmp.ne.s32.totalorder %s96, %s98
      %p105 = scmp.eq.s32.totalorder %s25, 1
      %p106 = por %p104, %p105
      %p107 = scmp.ne.s32.totalorder %s98, %s99
      %p108 = scmp.eq.s32.totalorder %s25, 0
      %p109 = por %p107, %p108
      %p110 = scmp.ne.s32.totalorder %s98, %s99
      %p111 = scmp.eq.s32.totalorder %s26, 1
      %p112 = por %p110, %p111
      %p114 = scmp.ne.s32.totalorder %s99, %s113
      %p115 = scmp.eq.s32.totalorder %s26, 0
      %p116 = por %p114, %p115
      %s118 = sadd.s32 %s117, 1
      %p121 = scmp.eq.s32.totalorder %s20, 1
      %p122 = scmp.ne.s32.totalorder %s117, %s119
      %p123 = scmp.eq.s32.totalorder %s20, 0
      %p124 = por %p122, %p123
      %p125 = scmp.ne.s32.totalorder %s117, %s119
      %p126 = scmp.eq.s32.totalorder %s25, 1
      %p127 = por %p125, %p126
      %p128 = scmp.ne.s32.totalorder %s119, %s120
      %p129 = scmp.eq.s32.totalorder %s25, 0
      %p130 = por %p128, %p129
      %p131 = scmp.ne.s32.totalorder %s119, %s120
      %p132 = scmp.eq.s32.totalorder %s26, 1
      %p133 = por %p131, %p132
      %p135 = scmp.ne.s32.totalorder %s120, %s134
      %p136 = scmp.eq.s32.totalorder %s26, 0
      %p137 = por %p135, %p136
      %s139 = sadd.s32 %s138, 1
      %p142 = scmp.eq.s32.totalorder %s20, 1
      %p143 = scmp.ne.s32.totalorder %s138, %s140
      %p144 = scmp.eq.s32.totalorder %s20, 0
      %p145 = por %p143, %p144
      %p146 = scmp.ne.s32.totalorder %s138, %s140
      %p147 = scmp.eq.s32.totalorder %s25, 1
      %p148 = por %p146, %p147
      %p149 = scmp.ne.s32.totalorder %s140, %s141
      %p150 = scmp.eq.s32.totalorder %s25, 0
      %p151 = por %p149, %p150
      %p152 = scmp.ne.s32.totalorder %s140, %s141
      %p153 = scmp.eq.s32.totalorder %s26, 1
      %p154 = por %p152, %p153
      %p156 = scmp.ne.s32.totalorder %s141, %s155
      %p157 = scmp.eq.s32.totalorder %s26, 0
      %p158 = por %p156, %p157
      %s160 = sadd.s32 %s159, 1
      %p163 = scmp.eq.s32.totalorder %s20, 1
      %p164 = scmp.ne.s32.totalorder %s159, %s161
      %p165 = scmp.eq.s32.totalorder %s20, 0
      %p166 = por %p164, %p165
      %p167 = scmp.ne.s32.totalorder %s159, %s161
      %p168 = scmp.eq.s32.totalorder %s25, 1
      %p169 = por %p167, %p168
      %p170 = scmp.ne.s32.totalorder %s161, %s162
      %p171 = scmp.eq.s32.totalorder %s25, 0
      %p172 = por %p170, %p171
      %p173 = scmp.ne.s32.totalorder %s161, %s162
      %p174 = scmp.eq.s32.totalorder %s26, 1
      %p175 = por %p173, %p174
      %p177 = scmp.ne.s32.totalorder %s162, %s176
      %p178 = scmp.eq.s32.totalorder %s26, 0
      %p179 = por %p177, %p178
      %s181 = sadd.s32 %s180, 1
      %p184 = scmp.eq.s32.totalorder %s20, 1
      %p185 = scmp.ne.s32.totalorder %s180, %s182
      %p186 = scmp.eq.s32.totalorder %s20, 0
      %p187 = por %p185, %p186
      %p188 = scmp.ne.s32.totalorder %s180, %s182
      %p189 = scmp.eq.s32.totalorder %s25, 1
      %p190 = por %p188, %p189
      %p191 = scmp.ne.s32.totalorder %s182, %s183
      %p192 = scmp.eq.s32.totalorder %s25, 0
      %p193 = por %p191, %p192
      %p194 = scmp.ne.s32.totalorder %s182, %s183
      %p195 = scmp.eq.s32.totalorder %s26, 1
      %p196 = por %p194, %p195
      %p198 = scmp.ne.s32.totalorder %s183, %s197
      %p199 = scmp.eq.s32.totalorder %s26, 0
      %p200 = por %p198, %p199
      %s202 = sadd.s32 %s201, 1
      %p205 = scmp.eq.s32.totalorder %s20, 1
      %p206 = scmp.ne.s32.totalorder %s201, %s203
      %p207 = scmp.eq.s32.totalorder %s20, 0
      %p208 = por %p206, %p207
      %p209 = scmp.ne.s32.totalorder %s201, %s203
      %p210 = scmp.eq.s32.totalorder %s25, 1
      %p211 = por %p209, %p210
      %p212 = scmp.ne.s32.totalorder %s203, %s204
      %p213 = scmp.eq.s32.totalorder %s25, 0
      %p214 = por %p212, %p213
      %p215 = scmp.ne.s32.totalorder %s203, %s204
      %p216 = scmp.eq.s32.totalorder %s26, 1
      %p217 = por %p215, %p216
      %p219 = scmp.ne.s32.totalorder %s204, %s218
      %p220 = scmp.eq.s32.totalorder %s26, 0
      %p221 = por %p219, %p220
      %s222 = ssub.s32 %s20, %s27
      %p223 = scmp.eq.s32.totalorder %s222, 0
      %s225 = sadd.s32 %s224, 1
      %s226 = scalar_select %p223, %s224, %s225
      %p229 = pneg %p223
      %p230 = scmp.eq.s32.totalorder %s20, 1
      %p231 = por %p229, %p230
      %p232 = scmp.ne.s32.totalorder %s224, %s227
      %p233 = scmp.eq.s32.totalorder %s20, 0
      %p234 = por %p232, %p233
      %p235 = scmp.ne.s32.totalorder %s224, %s227
      %p236 = scmp.eq.s32.totalorder %s25, 1
      %p237 = por %p235, %p236
      %p238 = scmp.ne.s32.totalorder %s227, %s228
      %p239 = scmp.eq.s32.totalorder %s25, 0
      %p240 = por %p238, %p239
      %p241 = scmp.ne.s32.totalorder %s227, %s228
      %p242 = scmp.eq.s32.totalorder %s26, 1
      %p243 = por %p241, %p242
      %p245 = scmp.ne.s32.totalorder %s228, %s244
      %p246 = scmp.eq.s32.totalorder %s26, 0
      %p247 = por %p245, %p246
      %p248 = scmp.le.s32.totalorder 1, %s20
      %p249 = scmp.lt.s32.totalorder %s20, 3
      %p250 = pnand %p248, %p249
      %p251 = pneg %p250
      // Predicated region
      $region9: #{tpu_custom_call.1} parent=5 // pred_check
        _
      $region10: #{tpu_custom_call.1} parent=5 // pred_check_branch
        %253 = sbr.rel (%p250) target = $region12
      $region11: #{tpu_custom_call.1} parent=5 // pred_region
        %s254 = ssub.s32 %s20, 1
        // Predicated region
        $region13: #{tpu_custom_call.1} parent=11 // pred_check
          %p255 = pneg %p67
        $region14: #{tpu_custom_call.1} parent=11 // pred_check_branch
          %257 = sbr.rel (%p255) target = $region16
        $region15: #{tpu_custom_call.1} parent=11 // pred_region
          %259 = vsyncadd [#allocation5], 0
          %s260 = sshll.u32 %s1, 4
          %s261 = int_to_ptr.hbm [resolvable:$true] %s260
          %s262 = sshll.u32 [#allocation4], 4
          %s263 = int_to_ptr.vmem [resolvable:$true] %s262
          %268 = dma.hbm_to_vmem [thread:$0]  %s261, 512, %s263, [#allocation5], 64, 64, 4
        $region16: #{tpu_custom_call.1} parent=11 // pred_fallthru
          _
        // Predicated region
        $region17: #{tpu_custom_call.1} parent=11 // pred_check
          %p269 = pneg %p88
        $region18: #{tpu_custom_call.1} parent=11 // pred_check_branch
          %271 = sbr.rel (%p269) target = $region20
        $region19: #{tpu_custom_call.1} parent=11 // pred_region
          _
        $region20: #{tpu_custom_call.1} parent=11 // pred_fallthru
          _
        // Predicated region
        $region21: #{tpu_custom_call.1} parent=11 // pred_check
          %p272 = pneg %p109
        $region22: #{tpu_custom_call.1} parent=11 // pred_check_branch
          %274 = sbr.rel (%p272) target = $region24
        $region23: #{tpu_custom_call.1} parent=11 // pred_region
          %276 = vsyncadd [#allocation5], 0
          %s277 = sshll.u32 %s3, 4
          %s278 = int_to_ptr.hbm [resolvable:$true] %s277
          %s279 = sshll.u32 [#allocation6], 4
          %s280 = int_to_ptr.vmem [resolvable:$true] %s279
          %285 = dma.hbm_to_vmem [thread:$0]  %s278, 1024, %s280, [#allocation5], 64, 64, 4
        $region24: #{tpu_custom_call.1} parent=11 // pred_fallthru
          _
        // Predicated region
        $region25: #{tpu_custom_call.1} parent=11 // pred_check
          %p286 = pneg %p130
        $region26: #{tpu_custom_call.1} parent=11 // pred_check_branch
          %288 = sbr.rel (%p286) target = $region28
        $region27: #{tpu_custom_call.1} parent=11 // pred_region
          _
        $region28: #{tpu_custom_call.1} parent=11 // pred_fallthru
          _
        // Predicated region
        $region29: #{tpu_custom_call.1} parent=11 // pred_check
          %p289 = pneg %p151
        $region30: #{tpu_custom_call.1} parent=11 // pred_check_branch
          %291 = sbr.rel (%p289) target = $region32
        $region31: #{tpu_custom_call.1} parent=11 // pred_region
          %293 = vsyncadd [#allocation8], 0
          %s294 = sshll.u32 %s5, 4
          %s295 = int_to_ptr.hbm [resolvable:$true] %s294
          %s296 = sshll.u32 [#allocation7], 4
          %s297 = int_to_ptr.vmem [resolvable:$true] %s296
          %302 = dma.hbm_to_vmem [thread:$0]  %s295, 1024, %s297, [#allocation8], 64, 64, 4
        $region32: #{tpu_custom_call.1} parent=11 // pred_fallthru
          _
        // Predicated region
        $region33: #{tpu_custom_call.1} parent=11 // pred_check
          %p303 = pneg %p172
        $region34: #{tpu_custom_call.1} parent=11 // pred_check_branch
          %305 = sbr.rel (%p303) target = $region36
        $region35: #{tpu_custom_call.1} parent=11 // pred_region
          _
        $region36: #{tpu_custom_call.1} parent=11 // pred_fallthru
          _
        // Predicated region
        $region37: #{tpu_custom_call.1} parent=11 // pred_check
          %p306 = pneg %p193
        $region38: #{tpu_custom_call.1} parent=11 // pred_check_branch
          %308 = sbr.rel (%p306) target = $region40
        $region39: #{tpu_custom_call.1} parent=11 // pred_region
          %310 = vsyncadd [#allocation8], 0
          %s311 = sshll.u32 %s7, 4
          %s312 = int_to_ptr.hbm [resolvable:$true] %s311
          %s313 = sshll.u32 [#allocation9], 4
          %s314 = int_to_ptr.vmem [resolvable:$true] %s313
          %319 = dma.hbm_to_vmem [thread:$0]  %s312, 1024, %s314, [#allocation8], 64, 64, 4
        $region40: #{tpu_custom_call.1} parent=11 // pred_fallthru
          _
        // Predicated region
        $region41: #{tpu_custom_call.1} parent=11 // pred_check
          %p320 = pneg %p214
        $region42: #{tpu_custom_call.1} parent=11 // pred_check_branch
          %322 = sbr.rel (%p320) target = $region44
        $region43: #{tpu_custom_call.1} parent=11 // pred_region
          _
        $region44: #{tpu_custom_call.1} parent=11 // pred_fallthru
          _
      $region12: #{tpu_custom_call.1} parent=5 // pred_fallthru
        _
      %p323 = scmp.lt.s32.totalorder %s20, 2
      // Predicated region
      $region45: #{tpu_custom_call.1} parent=5 // pred_check
        %p324 = pneg %p323
      $region46: #{tpu_custom_call.1} parent=5 // pred_check_branch
        %326 = sbr.rel (%p324) target = $region48
      $region47: #{tpu_custom_call.1} parent=5 // pred_region
        // Predicated region
        $region49: #{tpu_custom_call.1} parent=47 // pred_check
          %p327 = pneg %p40
        $region50: #{tpu_custom_call.1} parent=47 // pred_check_branch
          %329 = sbr.rel (%p327) target = $region52
        $region51: #{tpu_custom_call.1} parent=47 // pred_region
          %s330 = sand.u32 %s30, 1
          %s331 = scalar_lea.sflag [#allocation3], %s330
          %s332 = sand.u32 %s30, 1
          %s333 = smul.addr %s332, 8
          %s334 = scalar_lea.vmem [#allocation2], %s333
          %336 = vsyncadd %s331, 0
          %s337 = smul.addr %s20, 8
          %s338 = scalar_lea.hbm %s0, %s337
          %s340 = sshll.u32 %s338, 4
          %s341 = int_to_ptr.hbm [resolvable:$true] %s340
          %s342 = sshll.u32 %s334, 4
          %s343 = int_to_ptr.vmem [resolvable:$true] %s342
          %345 = dma.hbm_to_vmem [thread:$0]  %s341, 128, %s343, %s331
        $region52: #{tpu_custom_call.1} parent=47 // pred_fallthru
          _
      $region48: #{tpu_custom_call.1} parent=5 // pred_fallthru
        _
      %p346 = scmp.le.s32.totalorder 1, %s20
      %p347 = scmp.lt.s32.totalorder %s20, 3
      %p348 = pnand %p346, %p347
      %p349 = pneg %p348
      // Predicated region
      $region53: #{tpu_custom_call.1} parent=5 // pred_check
        _
      $region54: #{tpu_custom_call.1} parent=5 // pred_check_branch
        %351 = sbr.rel (%p348) target = $region56
      $region55: #{tpu_custom_call.1} parent=5 // pred_region
        %s352 = ssub.s32 %s20, 1
        %s353 = sand.u32 %s33, 1
        %s354 = scalar_lea.sflag [#allocation3], %s353
        %s355 = sand.u32 %s33, 1
        %s356 = smul.addr %s355, 8
        %s357 = scalar_lea.vmem [#allocation2], %s356
        // Predicated region
        $region57: #{tpu_custom_call.1} parent=55 // pred_check
          %p358 = pneg %p46
        $region58: #{tpu_custom_call.1} parent=55 // pred_check_branch
          %360 = sbr.rel (%p358) target = $region60
        $region59: #{tpu_custom_call.1} parent=55 // pred_region
          %362 = dma.done %s354, 128
        $region60: #{tpu_custom_call.1} parent=55 // pred_fallthru
          _
        // Predicated region
        $region61: #{tpu_custom_call.1} parent=55 // pred_check
          %p363 = pneg %p67
        $region62: #{tpu_custom_call.1} parent=55 // pred_check_branch
          %365 = sbr.rel (%p363) target = $region64
        $region63: #{tpu_custom_call.1} parent=55 // pred_region
          %367 = dma.done [#allocation5], 512
        $region64: #{tpu_custom_call.1} parent=55 // pred_fallthru
          _
        // Predicated region
        $region65: #{tpu_custom_call.1} parent=55 // pred_check
          %p368 = pneg %p109
        $region66: #{tpu_custom_call.1} parent=55 // pred_check_branch
          %370 = sbr.rel (%p368) target = $region68
        $region67: #{tpu_custom_call.1} parent=55 // pred_region
          %372 = dma.done [#allocation5], 1024
        $region68: #{tpu_custom_call.1} parent=55 // pred_fallthru
          _
        // Predicated region
        $region69: #{tpu_custom_call.1} parent=55 // pred_check
          %p373 = pneg %p151
        $region70: #{tpu_custom_call.1} parent=55 // pred_check_branch
          %375 = sbr.rel (%p373) target = $region72
        $region71: #{tpu_custom_call.1} parent=55 // pred_region
          %377 = dma.done [#allocation8], 1024
        $region72: #{tpu_custom_call.1} parent=55 // pred_fallthru
          _
        // Predicated region
        $region73: #{tpu_custom_call.1} parent=55 // pred_check
          %p378 = pneg %p193
        $region74: #{tpu_custom_call.1} parent=55 // pred_check_branch
          %380 = sbr.rel (%p378) target = $region76
        $region75: #{tpu_custom_call.1} parent=55 // pred_region
          %382 = dma.done [#allocation8], 1024
        $region76: #{tpu_custom_call.1} parent=55 // pred_fallthru
          _
        %s383 = sand.u32 %s33, 1
        %s384 = scalar_lea.sflag [#allocation3], %s383
        %s385 = sand.u32 %s33, 1
        %s386 = smul.addr %s385, 8
        %s387 = scalar_lea.vmem [#allocation2], %s386
        %p388 = pneg %p46
        %p389 = pneg %p43
        %p390 = pneg %p67
        %p391 = pneg %p64
        %p392 = pneg %p88
        %p393 = pneg %p85
        %p394 = pneg %p109
        %p395 = pneg %p106
        %p396 = pneg %p130
        %p397 = pneg %p127
        %p398 = pneg %p151
        %p399 = pneg %p148
        %p400 = pneg %p172
        %p401 = pneg %p169
        %p402 = pneg %p193
        %p403 = pneg %p190
        %p404 = pneg %p214
        %p405 = pneg %p211
        %p406 = pneg %p240
        %p407 = pneg %p237
        %p408 = scmp.lt.s32.totalorder %s25, 1
        %s409 = scalar_select %p408, %s25, 1
        %s410 = smul.addr %s409, 8
        %s411 = scalar_lea.vmem %s9, %s410
        %p412 = scmp.lt.s32.totalorder %s25, 1
        %s413 = scalar_select %p412, %s25, 1
        %s414 = smul.addr %s413, 8
        %s415 = scalar_lea.vmem %s9, %s414
        %v417 = vld [vmem:[%s357] sm:$0xff]
        %v418 = vpack.c.bf16 %v417, %v417
        %v419 = vld [vmem:[#allocation4] sm:$0xf]
        %v420 = vld [vmem:[#allocation4 + $0x4] sm:$0xf]
        %v421 = vld [vmem:[#allocation4 + $0x8] sm:$0xf]
        %v422 = vld [vmem:[#allocation4 + $0xc] sm:$0xf]
        %v423 = vld [vmem:[#allocation4 + $0x10] sm:$0xf]
        %v424 = vld [vmem:[#allocation4 + $0x14] sm:$0xf]
        %v425 = vld [vmem:[#allocation4 + $0x18] sm:$0xf]
        %v426 = vld [vmem:[#allocation4 + $0x1c] sm:$0xf]
        %v427 = vld [vmem:[%s2] sm:$0x1]
        %v429 = vperm.slane %v427, 0
        %v439 = vunpack.c.l.b16 %v419
        %v440 = vunpack.c.l.b16 %v420
        %v441 = vunpack.c.l.b16 %v421
        %v442 = vunpack.c.l.b16 %v422
        %v443 = vunpack.c.l.b16 %v423
        %v444 = vunpack.c.l.b16 %v424
        %v445 = vunpack.c.l.b16 %v425
        %v446 = vunpack.c.l.b16 %v426
        %v447 = vpack.c.b16 %v440, %v439
        %v448 = vpack.c.b16 %v442, %v441
        %v449 = vpack.c.b16 %v444, %v443
        %v450 = vpack.c.b16 %v446, %v445
        %vm455 = vcmask 523264
        %v457 = vsel %vm455, %v418, 0
        %459 = vmatpush.bf16.msra.mxu0 0
        %460 = vmatpush.bf16.msra.mxu0 0
        %461 = vmatpush.bf16.msra.mxu0 0
        %462 = vmatpush.bf16.msra.mxu0 0
        %463 = vmatpush.bf16.msra.mxu0 %v450
        %464 = vmatpush.bf16.msra.mxu0 %v449
        %465 = vmatpush.bf16.msra.mxu0 %v448
        %466 = vmatpush.bf16.msra.mxu0 %v447
        %467 = vmatmul.bf16.gmra.mxu0 %v457
        %v468 = vpop.f32.mrf.mxu0
        %v469 = vadd.f32 %v429, %v468
        %v470 = vpop.f32.mrf.mxu0
        %471 = vdwg.mxu0
        %v472 = vmax.f32 %v469, 0.0
        %v473 = vpack.c.bf16 %v472, %v472
        %v474 = vld [vmem:[#allocation6] sm:$0xf]
        %v475 = vld [vmem:[#allocation6 + $0x4] sm:$0xf]
        %v476 = vld [vmem:[#allocation6 + $0x8] sm:$0xf]
        %v477 = vld [vmem:[#allocation6 + $0xc] sm:$0xf]
        %v478 = vld [vmem:[#allocation6 + $0x10] sm:$0xf]
        %v479 = vld [vmem:[#allocation6 + $0x14] sm:$0xf]
        %v480 = vld [vmem:[#allocation6 + $0x18] sm:$0xf]
        %v481 = vld [vmem:[#allocation6 + $0x1c] sm:$0xf]
        %v482 = vld [vmem:[#allocation6 + $0x20] sm:$0xf]
        %v483 = vld [vmem:[#allocation6 + $0x24] sm:$0xf]
        %v484 = vld [vmem:[#allocation6 + $0x28] sm:$0xf]
        %v485 = vld [vmem:[#allocation6 + $0x2c] sm:$0xf]
        %v486 = vld [vmem:[#allocation6 + $0x30] sm:$0xf]
        %v487 = vld [vmem:[#allocation6 + $0x34] sm:$0xf]
        %v488 = vld [vmem:[#allocation6 + $0x38] sm:$0xf]
        %v489 = vld [vmem:[#allocation6 + $0x3c] sm:$0xf]
        %v490 = vld [vmem:[%s4] sm:$0x1]
        %v492 = vperm.slane %v490, 0
        %v510 = vunpack.c.l.b16 %v474
        %v511 = vunpack.c.l.b16 %v475
        %v512 = vunpack.c.l.b16 %v476
        %v513 = vunpack.c.l.b16 %v477
        %v514 = vunpack.c.l.b16 %v478
        %v515 = vunpack.c.l.b16 %v479
        %v516 = vunpack.c.l.b16 %v480
        %v517 = vunpack.c.l.b16 %v481
        %v518 = vunpack.c.l.b16 %v482
        %v519 = vunpack.c.l.b16 %v483
        %v520 = vunpack.c.l.b16 %v484
        %v521 = vunpack.c.l.b16 %v485
        %v522 = vunpack.c.l.b16 %v486
        %v523 = vunpack.c.l.b16 %v487
        %v524 = vunpack.c.l.b16 %v488
        %v525 = vunpack.c.l.b16 %v489
        %v526 = vpack.c.b16 %v511, %v510
        %v527 = vpack.c.b16 %v513, %v512
        %v528 = vpack.c.b16 %v515, %v514
        %v529 = vpack.c.b16 %v517, %v516
        %v530 = vpack.c.b16 %v519, %v518
        %v531 = vpack.c.b16 %v521, %v520
        %v532 = vpack.c.b16 %v523, %v522
        %v533 = vpack.c.b16 %v525, %v524
        %542 = vmatpush.bf16.msra.mxu0 %v533
        %543 = vmatpush.bf16.msra.mxu0 %v532
        %544 = vmatpush.bf16.msra.mxu0 %v531
        %545 = vmatpush.bf16.msra.mxu0 %v530
        %546 = vmatpush.bf16.msra.mxu0 %v529
        %547 = vmatpush.bf16.msra.mxu0 %v528
        %548 = vmatpush.bf16.msra.mxu0 %v527
        %549 = vmatpush.bf16.msra.mxu0 %v526
        %550 = vmatmul.bf16.gmra.mxu0 %v473
        %v551 = vpop.f32.mrf.mxu0
        %v552 = vadd.f32 %v492, %v551
        %v553 = vpop.f32.mrf.mxu0
        %554 = vdwg.mxu0
        %v555 = vmax.f32 %v552, 0.0
        %v556 = vpack.c.bf16 %v555, %v555
        %v557 = vld [vmem:[#allocation7] sm:$0xf]
        %v558 = vld [vmem:[#allocation7 + $0x4] sm:$0xf]
        %v559 = vld [vmem:[#allocation7 + $0x8] sm:$0xf]
        %v560 = vld [vmem:[#allocation7 + $0xc] sm:$0xf]
        %v561 = vld [vmem:[#allocation7 + $0x10] sm:$0xf]
        %v562 = vld [vmem:[#allocation7 + $0x14] sm:$0xf]
        %v563 = vld [vmem:[#allocation7 + $0x18] sm:$0xf]
        %v564 = vld [vmem:[#allocation7 + $0x1c] sm:$0xf]
        %v565 = vld [vmem:[#allocation7 + $0x20] sm:$0xf]
        %v566 = vld [vmem:[#allocation7 + $0x24] sm:$0xf]
        %v567 = vld [vmem:[#allocation7 + $0x28] sm:$0xf]
        %v568 = vld [vmem:[#allocation7 + $0x2c] sm:$0xf]
        %v569 = vld [vmem:[#allocation7 + $0x30] sm:$0xf]
        %v570 = vld [vmem:[#allocation7 + $0x34] sm:$0xf]
        %v571 = vld [vmem:[#allocation7 + $0x38] sm:$0xf]
        %v572 = vld [vmem:[#allocation7 + $0x3c] sm:$0xf]
        %v573 = vld [vmem:[%s6] sm:$0x1]
        %v575 = vperm.slane %v573, 0
        %v593 = vunpack.c.l.b16 %v557
        %v594 = vunpack.c.l.b16 %v558
        %v595 = vunpack.c.l.b16 %v559
        %v596 = vunpack.c.l.b16 %v560
        %v597 = vunpack.c.l.b16 %v561
        %v598 = vunpack.c.l.b16 %v562
        %v599 = vunpack.c.l.b16 %v563
        %v600 = vunpack.c.l.b16 %v564
        %v601 = vunpack.c.l.b16 %v565
        %v602 = vunpack.c.l.b16 %v566
        %v603 = vunpack.c.l.b16 %v567
        %v604 = vunpack.c.l.b16 %v568
        %v605 = vunpack.c.l.b16 %v569
        %v606 = vunpack.c.l.b16 %v570
        %v607 = vunpack.c.l.b16 %v571
        %v608 = vunpack.c.l.b16 %v572
        %v609 = vpack.c.b16 %v594, %v593
        %v610 = vpack.c.b16 %v596, %v595
        %v611 = vpack.c.b16 %v598, %v597
        %v612 = vpack.c.b16 %v600, %v599
        %v613 = vpack.c.b16 %v602, %v601
        %v614 = vpack.c.b16 %v604, %v603
        %v615 = vpack.c.b16 %v606, %v605
        %v616 = vpack.c.b16 %v608, %v607
        %625 = vmatpush.bf16.msra.mxu0 %v616
        %626 = vmatpush.bf16.msra.mxu0 %v615
        %627 = vmatpush.bf16.msra.mxu0 %v614
        %628 = vmatpush.bf16.msra.mxu0 %v613
        %629 = vmatpush.bf16.msra.mxu0 %v612
        %630 = vmatpush.bf16.msra.mxu0 %v611
        %631 = vmatpush.bf16.msra.mxu0 %v610
        %632 = vmatpush.bf16.msra.mxu0 %v609
        %633 = vmatmul.bf16.gmra.mxu0 %v556
        %v634 = vpop.f32.mrf.mxu0
        %v635 = vadd.f32 %v575, %v634
        %v636 = vpop.f32.mrf.mxu0
        %637 = vdwg.mxu0
        %v638 = vmax.f32 %v635, 0.0
        %v639 = vpack.c.bf16 %v638, %v638
        %640 = vmatpush.bf16.msra.mxu0 %v616
        %641 = vmatpush.bf16.msra.mxu0 %v615
        %642 = vmatpush.bf16.msra.mxu0 %v614
        %643 = vmatpush.bf16.msra.mxu0 %v613
        %644 = vmatpush.bf16.msra.mxu0 %v612
        %645 = vmatpush.bf16.msra.mxu0 %v611
        %646 = vmatpush.bf16.msra.mxu0 %v610
        %647 = vmatpush.bf16.msra.mxu0 %v609
        %648 = vmatmul.bf16.gmra.mxu0 %v639
        %v649 = vpop.f32.mrf.mxu0
        %v650 = vadd.f32 %v575, %v649
        %v651 = vpop.f32.mrf.mxu0
        %652 = vdwg.mxu0
        %v653 = vmax.f32 %v650, 0.0
        %v654 = vpack.c.bf16 %v653, %v653
        %v655 = vld [vmem:[#allocation9] sm:$0xf]
        %v656 = vld [vmem:[#allocation9 + $0x4] sm:$0xf]
        %v657 = vld [vmem:[#allocation9 + $0x8] sm:$0xf]
        %v658 = vld [vmem:[#allocation9 + $0xc] sm:$0xf]
        %v659 = vld [vmem:[#allocation9 + $0x10] sm:$0xf]
        %v660 = vld [vmem:[#allocation9 + $0x14] sm:$0xf]
        %v661 = vld [vmem:[#allocation9 + $0x18] sm:$0xf]
        %v662 = vld [vmem:[#allocation9 + $0x1c] sm:$0xf]
        %v663 = vld [vmem:[#allocation9 + $0x20] sm:$0xf]
        %v664 = vld [vmem:[#allocation9 + $0x24] sm:$0xf]
        %v665 = vld [vmem:[#allocation9 + $0x28] sm:$0xf]
        %v666 = vld [vmem:[#allocation9 + $0x2c] sm:$0xf]
        %v667 = vld [vmem:[#allocation9 + $0x30] sm:$0xf]
        %v668 = vld [vmem:[#allocation9 + $0x34] sm:$0xf]
        %v669 = vld [vmem:[#allocation9 + $0x38] sm:$0xf]
        %v670 = vld [vmem:[#allocation9 + $0x3c] sm:$0xf]
        %v671 = vld [vmem:[%s8] sm:$0x1]
        %v673 = vperm.slane %v671, 0
        %v691 = vunpack.c.l.b16 %v655
        %v692 = vunpack.c.l.b16 %v656
        %v693 = vunpack.c.l.b16 %v657
        %v694 = vunpack.c.l.b16 %v658
        %v695 = vunpack.c.l.b16 %v659
        %v696 = vunpack.c.l.b16 %v660
        %v697 = vunpack.c.l.b16 %v661
        %v698 = vunpack.c.l.b16 %v662
        %v699 = vunpack.c.l.b16 %v663
        %v700 = vunpack.c.l.b16 %v664
        %v701 = vunpack.c.l.b16 %v665
        %v702 = vunpack.c.l.b16 %v666
        %v703 = vunpack.c.l.b16 %v667
        %v704 = vunpack.c.l.b16 %v668
        %v705 = vunpack.c.l.b16 %v669
        %v706 = vunpack.c.l.b16 %v670
        %v707 = vpack.c.b16 %v692, %v691
        %v708 = vpack.c.b16 %v694, %v693
        %v709 = vpack.c.b16 %v696, %v695
        %v710 = vpack.c.b16 %v698, %v697
        %v711 = vpack.c.b16 %v700, %v699
        %v712 = vpack.c.b16 %v702, %v701
        %v713 = vpack.c.b16 %v704, %v703
        %v714 = vpack.c.b16 %v706, %v705
        %723 = vmatpush.bf16.msra.mxu0 %v714
        %724 = vmatpush.bf16.msra.mxu0 %v713
        %725 = vmatpush.bf16.msra.mxu0 %v712
        %726 = vmatpush.bf16.msra.mxu0 %v711
        %727 = vmatpush.bf16.msra.mxu0 %v710
        %728 = vmatpush.bf16.msra.mxu0 %v709
        %729 = vmatpush.bf16.msra.mxu0 %v708
        %730 = vmatpush.bf16.msra.mxu0 %v707
        %731 = vmatmul.bf16.gmra.mxu0 %v654
        %v732 = vpop.f32.mrf.mxu0
        %v733 = vadd.f32 %v673, %v732
        %v734 = vpop.f32.mrf.mxu0
        %735 = vdwg.mxu0
        %vm736 = vcmask 7168
        %737 = vst.msk [vmem:[%s415] sm:$0xff] %vm736, %v733
        %p738 = scmp.lt.s32.totalorder %s25, 1
        %s739 = scalar_select %p738, %s25, 1
        %s740 = smul.addr %s739, 8
        %s741 = scalar_lea.vmem %s9, %s740
        // Predicated region
        $region77: #{tpu_custom_call.1} parent=55 // pred_check
          %p742 = pneg %p237
        $region78: #{tpu_custom_call.1} parent=55 // pred_check_branch
          %744 = sbr.rel (%p742) target = $region80
        $region79: #{tpu_custom_call.1} parent=55 // pred_region
          _
        $region80: #{tpu_custom_call.1} parent=55 // pred_fallthru
          _
      $region56: #{tpu_custom_call.1} parent=5 // pred_fallthru
        _
      %p745 = scmp.le.s32.totalorder 2, %s20
      // Predicated region
      $region81: #{tpu_custom_call.1} parent=5 // pred_check
        %p746 = pneg %p745
      $region82: #{tpu_custom_call.1} parent=5 // pred_check_branch
        %748 = sbr.rel (%p746) target = $region84
      $region83: #{tpu_custom_call.1} parent=5 // pred_region
        %s749 = ssub.s32 %s20, 2
        // Predicated region
        $region85: #{tpu_custom_call.1} parent=83 // pred_check
          %p750 = pneg %p243
        $region86: #{tpu_custom_call.1} parent=83 // pred_check_branch
          %752 = sbr.rel (%p750) target = $region88
        $region87: #{tpu_custom_call.1} parent=83 // pred_region
          %p753 = scmp.lt.s32.totalorder %s26, 1
          %s754 = scalar_select %p753, %s26, 1
          %s755 = smul.addr %s754, 8
          %s756 = scalar_lea.vmem %s9, %s755
        $region88: #{tpu_custom_call.1} parent=83 // pred_fallthru
          _
      $region84: #{tpu_custom_call.1} parent=5 // pred_fallthru
        _
    $region6: #{tpu_custom_call.1} parent=1 // loop_footer
      %s24 = sadd.s32 1, %s20
    $region7: #{tpu_custom_call.1} parent=1 // loop_footer_branch
      %19 = sbr.rel target = $region3
    $region8: #{tpu_custom_call.1} parent=1 // loop_exit
      _
    %757 = vsyncpa [#allocation3], 1
    %s758 = scalar_lea.sflag [#allocation3], 1
    %759 = vsyncpa %s758, 1
    %760 = vsyncpa [#allocation5], 1
    %761 = vsyncpa [#allocation8], 1

</llo_original>
